<compile_context>
chip_gen: v5e
topology: v5e:2x2
jax: 0.10.0
libtpu: 0.0.40
codegen_flags: <defaults>
</compile_context>

<pallas_src>
import math

import numpy as np

import jax
import jax.numpy as jnp
from jax.experimental import pallas as pl
from jax.experimental.pallas import tpu as pltpu


def _mm(a, b, trans_b=False):
    """2-D matmul with f32 accumulation; optionally contract rhs dim 1."""
    dims = (((1,), (1 if trans_b else 0,)), ((), ()))
    return jax.lax.dot_general(a, b, dimension_numbers=dims,
                               preferred_element_type=jnp.float32)


def _sigmoid(z):
    return 1.0 / (1.0 + jnp.exp(-z))


def _asf_local_att_kernel(x_ref, m_row_ref, m_col_ref, w1_ref, b1_ref,
                          wh_ref, ww_ref, o_ref):
    bt = x_ref.shape[0]
    h = m_row_ref.shape[1]
    w = m_col_ref.shape[1]
    inv_w = 1.0 / w
    inv_h = 1.0 / h

    m_row = m_row_ref[...]        # (HW, H)  m_row[l, i] = 1 iff l // W == i
    m_col = m_col_ref[...]        # (HW, W)  m_col[l, j] = 1 iff l %  W == j
    w1 = w1_ref[...]              # (Cr, C)  BN-folded 1x1 squeeze conv
    b1 = b1_ref[...]              # (Cr, 1)  BN-folded bias
    wh = wh_ref[...]              # (C, Cr)  F_h
    ww = ww_ref[...]              # (C, Cr)  F_w

    for b in range(bt):           # static unroll over the (small) batch tile
        xb = x_ref[b].astype(jnp.float32)                  # (C, HW), f32 accumulation
        # Row / column means via selector matmuls (keeps every op 2-D, lane-dense).
        mean_h = _mm(xb, m_row) * inv_w                    # (C, H)   mean over W
        mean_w = _mm(xb, m_col) * inv_h                    # (C, W)   mean over H
        # Shared 1x1 squeeze conv + folded BN + ReLU. Applying it separately to
        # the two halves is exactly equivalent to conv/BN(eval)/ReLU on the
        # concatenated (H+W) map, since all three ops are pointwise along it.
        y_h = jnp.maximum(_mm(w1, mean_h) + b1, 0.0)       # (Cr, H)
        y_w = jnp.maximum(_mm(w1, mean_w) + b1, 0.0)       # (Cr, W)
        s_h = _sigmoid(_mm(wh, y_h))                       # (C, H)
        s_w = _sigmoid(_mm(ww, y_w))                       # (C, W)
        # gate[c, i*W + j] = s_h[c, i] * s_w[c, j], built lane-dense with the
        # same selectors (transposed contraction) -> no 3-D broadcasts needed.
        gate = _mm(s_h, m_row, trans_b=True) * _mm(s_w, m_col, trans_b=True)  # (C, HW)
        # Re-read the tile from VMEM for the multiply (don't keep xb live
        # across the gate computation for big tiles; VMEM reads are cheap).
        o_ref[b] = (x_ref[b].astype(jnp.float32) * gate).astype(o_ref.dtype)


def _spatial_selectors(h, w):
    """Constant 0/1 matrices mapping the flat spatial index to its row / column."""
    l = np.arange(h * w)
    m_row = (l[:, None] // w == np.arange(h)[None, :]).astype(np.float32)  # (HW, H)
    m_col = (l[:, None] % w == np.arange(w)[None, :]).astype(np.float32)   # (HW, W)
    return jnp.asarray(m_row), jnp.asarray(m_col)


def _pick_batch_tile(batch, per_batch_bytes, target_bytes=1 << 20):
    """Largest divisor of `batch` whose x block stays under ~target_bytes,
    preferring >=2 grid steps so the parallel axis can shard across v7x cores."""
    divisors = [d for d in range(1, batch + 1) if batch % d == 0]
    fitting = [d for d in divisors if d * per_batch_bytes <= target_bytes] or [1]
    bt = max(fitting)
    if batch // bt < 2:
        two_step = [d for d in fitting if batch // d >= 2]
        if two_step:
            bt = max(two_step)
    return bt


def asf_local_att_forward(x, conv1x1_w, bn_gamma, bn_beta, bn_mean, bn_var,
                          f_h_w, f_w_w, *, eps=1e-5):
    """x: (B, C, H, W); conv1x1_w: (Cr, C); f_h_w / f_w_w: (C, Cr); bn_*: (Cr,)."""
    B, C, H, W = x.shape
    Cr = conv1x1_w.shape[0]
    HW = H * W
    # TODO(synk): for spatial sizes where H*W is not a multiple of 128, pad W in
    # the wrapper (and crop the output) to keep stores lane-dense / unmasked.

    # Fold eval-mode BatchNorm (per-Cr-channel affine) into the 1x1 squeeze conv.
    # TODO(synk): training-mode BatchNorm batch statistics are not computed
    # in-kernel; inference (running-stats) semantics are implemented.
    scale = (bn_gamma / jnp.sqrt(bn_var + eps)).astype(jnp.float32)           # (Cr,)
    w1f = (conv1x1_w.astype(jnp.float32) * scale[:, None])                    # (Cr, C)
    b1f = (bn_beta - bn_mean * scale).reshape(Cr, 1).astype(jnp.float32)      # (Cr, 1)
    whf = f_h_w.astype(jnp.float32)                                           # (C, Cr)
    wwf = f_w_w.astype(jnp.float32)                                           # (C, Cr)

    m_row, m_col = _spatial_selectors(H, W)   # (HW, H), (HW, W) constants

    x_flat = x.reshape(B, C, HW)              # lane-dense spatial layout

    itemsize = jnp.dtype(x.dtype).itemsize
    bt = _pick_batch_tile(B, C * HW * itemsize)
    grid = (B // bt,)

    block_bytes = bt * C * HW * itemsize
    aux_bytes = 4 * (HW * (H + W) + Cr * C + Cr + 2 * C * Cr)
    vmem_limit = int(min(48 * 1024 * 1024,
                         max(8 * 1024 * 1024,
                             4 * block_bytes + 2 * aux_bytes + (2 << 20))))

    out = pl.pallas_call(
        _asf_local_att_kernel,
        out_shape=jax.ShapeDtypeStruct((B, C, HW), x.dtype),
        grid_spec=pltpu.PrefetchScalarGridSpec(
            num_scalar_prefetch=0,
            grid=grid,
            in_specs=[
                pl.BlockSpec((bt, C, HW), lambda i: (i, 0, 0)),  # x (streamed)
                pl.BlockSpec((HW, H), lambda i: (0, 0)),         # row selector (loaded once)
                pl.BlockSpec((HW, W), lambda i: (0, 0)),         # col selector (loaded once)
                pl.BlockSpec((Cr, C), lambda i: (0, 0)),         # BN-folded 1x1 conv
                pl.BlockSpec((Cr, 1), lambda i: (0, 0)),         # BN-folded bias
                pl.BlockSpec((C, Cr), lambda i: (0, 0)),         # F_h weight
                pl.BlockSpec((C, Cr), lambda i: (0, 0)),         # F_w weight
            ],
            out_specs=pl.BlockSpec((bt, C, HW), lambda i: (i, 0, 0)),
        ),
        compiler_params=pltpu.CompilerParams(
            dimension_semantics=("parallel",),
            vmem_limit_bytes=vmem_limit,
        ),
    )(x_flat, m_row, m_col, w1f, b1f, whf, wwf)

    return out.reshape(B, C, H, W)


def _reference(x, w1, gamma, beta, mean, var, wh, ww, eps=1e-5):
    """Pure-JAX mirror of the PyTorch forward (eval-mode BatchNorm)."""
    B, C, H, W = x.shape
    hp = jax.lax.Precision.HIGHEST
    x_h = jnp.mean(x, axis=3)                                  # (B, C, H)
    x_w = jnp.mean(x, axis=2)                                  # (B, C, W)
    feat = jnp.concatenate([x_h, x_w], axis=2)                 # (B, C, H+W)
    y = jnp.einsum('rc,bcl->brl', w1, feat, precision=hp)      # 1x1 conv, no bias
    y = (y - mean[None, :, None]) * (gamma[None, :, None] /
                                     jnp.sqrt(var[None, :, None] + eps)) \
        + beta[None, :, None]
    y = jnp.maximum(y, 0.0)
    y_h, y_w = y[:, :, :H], y[:, :, H:]
    s_h = jax.nn.sigmoid(jnp.einsum('cr,brh->bch', wh, y_h, precision=hp))
    s_w = jax.nn.sigmoid(jnp.einsum('cr,brw->bcw', ww, y_w, precision=hp))
    return x * s_h[:, :, :, None] * s_w[:, :, None, :]


if __name__ == "__main__":
    channel, reduction = 32, 16
    B, H, W = 2, 16, 16
    Cr = channel // reduction  # = 2

    key = jax.random.PRNGKey(0)
    kx, k1, k2, k3, kg, kb, km, kv = jax.random.split(key, 8)

    x = jax.random.normal(kx, (B, channel, H, W), dtype=jnp.float32)

    # 1x1 conv weights (no bias), PyTorch-like init scale.
    w1 = jax.random.normal(k1, (Cr, channel), dtype=jnp.float32) / math.sqrt(channel)
    wh = jax.random.normal(k2, (channel, Cr), dtype=jnp.float32) / math.sqrt(Cr)
    ww = jax.random.normal(k3, (channel, Cr), dtype=jnp.float32) / math.sqrt(Cr)

    # BatchNorm2d (eval-mode) parameters / running statistics.
    bn_gamma = jax.random.uniform(kg, (Cr,), jnp.float32, 0.5, 1.5)
    bn_beta = jax.random.normal(kb, (Cr,), jnp.float32) * 0.1
    bn_mean = jax.random.normal(km, (Cr,), jnp.float32) * 0.1
    bn_var = jax.random.uniform(kv, (Cr,), jnp.float32, 0.5, 1.5)

    y = asf_local_att_forward(x, w1, bn_gamma, bn_beta, bn_mean, bn_var, wh, ww)
    y = jax.block_until_ready(y)

    y_ref = _reference(x, w1, bn_gamma, bn_beta, bn_mean, bn_var, wh, ww)
    assert y.shape == x.shape
    assert jnp.allclose(y, y_ref, atol=1e-5, rtol=1e-5), \
        float(jnp.max(jnp.abs(y - y_ref)))

    print("KERNEL_OK")
</pallas_src>

<mosaic_0001>
module attributes {stable_mosaic.version = 11 : i64} {
  func.func @_asf_local_att_kernel(%arg0: i32, %arg1: memref<1x32x256xf32, #tpu.memory_space<vmem>>, %arg2: memref<256x16xf32, #tpu.memory_space<vmem>>, %arg3: memref<256x16xf32, #tpu.memory_space<vmem>>, %arg4: memref<2x32xf32, #tpu.memory_space<vmem>>, %arg5: memref<2x1xf32, #tpu.memory_space<vmem>>, %arg6: memref<32x2xf32, #tpu.memory_space<vmem>>, %arg7: memref<32x2xf32, #tpu.memory_space<vmem>>, %arg8: memref<1x32x256xf32, #tpu.memory_space<vmem>>) attributes {dimension_semantics = [#tpu.dimension_semantics<parallel>], iteration_bounds = array<i64: 2>, scalar_prefetch = 0 : i64, scratch_operands = 0 : i64, tpu.core_type = #tpu.core_type<tc>, window_params = [{transform_indices = @transform_0, window_bounds = array<i64: 1, 32, 256>}, {pipeline_mode = #tpu.pipeline_mode<synchronous>, transform_indices = @transform_1, window_bounds = array<i64: 256, 16>}, {pipeline_mode = #tpu.pipeline_mode<synchronous>, transform_indices = @transform_2, window_bounds = array<i64: 256, 16>}, {pipeline_mode = #tpu.pipeline_mode<synchronous>, transform_indices = @transform_3, window_bounds = array<i64: 2, 32>}, {pipeline_mode = #tpu.pipeline_mode<synchronous>, transform_indices = @transform_4, window_bounds = array<i64: 2, 1>}, {pipeline_mode = #tpu.pipeline_mode<synchronous>, transform_indices = @transform_5, window_bounds = array<i64: 32, 2>}, {pipeline_mode = #tpu.pipeline_mode<synchronous>, transform_indices = @transform_6, window_bounds = array<i64: 32, 2>}, {transform_indices = @transform_7, window_bounds = array<i64: 1, 32, 256>}]} {
    %c0 = arith.constant 0 : index
    %c0_0 = arith.constant 0 : index
    %0 = vector.load %arg2[%c0, %c0_0] : memref<256x16xf32, #tpu.memory_space<vmem>>, vector<256x16xf32>
    %c0_1 = arith.constant 0 : index
    %c0_2 = arith.constant 0 : index
    %1 = vector.load %arg3[%c0_1, %c0_2] : memref<256x16xf32, #tpu.memory_space<vmem>>, vector<256x16xf32>
    %c0_3 = arith.constant 0 : index
    %c0_4 = arith.constant 0 : index
    %2 = vector.load %arg4[%c0_3, %c0_4] : memref<2x32xf32, #tpu.memory_space<vmem>>, vector<2x32xf32>
    %c0_5 = arith.constant 0 : index
    %c0_6 = arith.constant 0 : index
    %3 = vector.load %arg5[%c0_5, %c0_6] : memref<2x1xf32, #tpu.memory_space<vmem>>, vector<2x1xf32>
    %c0_7 = arith.constant 0 : index
    %c0_8 = arith.constant 0 : index
    %4 = vector.load %arg6[%c0_7, %c0_8] : memref<32x2xf32, #tpu.memory_space<vmem>>, vector<32x2xf32>
    %c0_9 = arith.constant 0 : index
    %c0_10 = arith.constant 0 : index
    %5 = vector.load %arg7[%c0_9, %c0_10] : memref<32x2xf32, #tpu.memory_space<vmem>>, vector<32x2xf32>
    %c0_11 = arith.constant 0 : index
    %c0_12 = arith.constant 0 : index
    %c0_13 = arith.constant 0 : index
    %6 = vector.load %arg1[%c0_11, %c0_12, %c0_13] : memref<1x32x256xf32, #tpu.memory_space<vmem>>, vector<1x32x256xf32>
    %7 = vector.shape_cast %6 : vector<1x32x256xf32> to vector<32x256xf32>
    %cst = arith.constant dense<0.000000e+00> : vector<32x16xf32>
    %8 = tpu.matmul %7, %0, %cst {dimension_numbers = #tpu.dot_dimension_numbers<[1], [0], [0], [1], [0, 0, 1, 1], [], []>} : vector<32x256xf32>, vector<256x16xf32>, vector<32x16xf32> -> vector<32x16xf32>
    %cst_14 = arith.constant 6.250000e-02 : f32
    %9 = vector.broadcast %cst_14 : f32 to vector<32x16xf32>
    %10 = arith.mulf %8, %9 : vector<32x16xf32>
    %cst_15 = arith.constant dense<0.000000e+00> : vector<32x16xf32>
    %11 = tpu.matmul %7, %1, %cst_15 {dimension_numbers = #tpu.dot_dimension_numbers<[1], [0], [0], [1], [0, 0, 1, 1], [], []>} : vector<32x256xf32>, vector<256x16xf32>, vector<32x16xf32> -> vector<32x16xf32>
    %cst_16 = arith.constant 6.250000e-02 : f32
    %12 = vector.broadcast %cst_16 : f32 to vector<32x16xf32>
    %13 = arith.mulf %11, %12 : vector<32x16xf32>
    %cst_17 = arith.constant dense<0.000000e+00> : vector<2x16xf32>
    %14 = tpu.matmul %2, %10, %cst_17 {dimension_numbers = #tpu.dot_dimension_numbers<[1], [0], [0], [1], [0, 0, 1, 1], [], []>} : vector<2x32xf32>, vector<32x16xf32>, vector<2x16xf32> -> vector<2x16xf32>
    %15 = vector.broadcast %3 : vector<2x1xf32> to vector<2x16xf32>
    %16 = arith.addf %14, %15 : vector<2x16xf32>
    %cst_18 = arith.constant 0.000000e+00 : f32
    %17 = vector.broadcast %cst_18 : f32 to vector<2x16xf32>
    %18 = arith.maximumf %16, %17 : vector<2x16xf32>
    %cst_19 = arith.constant dense<0.000000e+00> : vector<2x16xf32>
    %19 = tpu.matmul %2, %13, %cst_19 {dimension_numbers = #tpu.dot_dimension_numbers<[1], [0], [0], [1], [0, 0, 1, 1], [], []>} : vector<2x32xf32>, vector<32x16xf32>, vector<2x16xf32> -> vector<2x16xf32>
    %20 = vector.broadcast %3 : vector<2x1xf32> to vector<2x16xf32>
    %21 = arith.addf %19, %20 : vector<2x16xf32>
    %cst_20 = arith.constant 0.000000e+00 : f32
    %22 = vector.broadcast %cst_20 : f32 to vector<2x16xf32>
    %23 = arith.maximumf %21, %22 : vector<2x16xf32>
    %cst_21 = arith.constant dense<0.000000e+00> : vector<32x16xf32>
    %24 = tpu.matmul %4, %18, %cst_21 {dimension_numbers = #tpu.dot_dimension_numbers<[1], [0], [0], [1], [0, 0, 1, 1], [], []>} : vector<32x2xf32>, vector<2x16xf32>, vector<32x16xf32> -> vector<32x16xf32>
    %cst_22 = arith.constant 0.000000e+00 : f32
    %25 = vector.broadcast %cst_22 : f32 to vector<32x16xf32>
    %26 = arith.subf %25, %24 : vector<32x16xf32>
    %27 = math.exp %26 : vector<32x16xf32>
    %cst_23 = arith.constant 1.000000e+00 : f32
    %28 = vector.broadcast %cst_23 : f32 to vector<32x16xf32>
    %29 = arith.addf %28, %27 : vector<32x16xf32>
    %cst_24 = arith.constant 1.000000e+00 : f32
    %30 = vector.broadcast %cst_24 : f32 to vector<32x16xf32>
    %31 = arith.divf %30, %29 : vector<32x16xf32>
    %cst_25 = arith.constant dense<0.000000e+00> : vector<32x16xf32>
    %32 = tpu.matmul %5, %23, %cst_25 {dimension_numbers = #tpu.dot_dimension_numbers<[1], [0], [0], [1], [0, 0, 1, 1], [], []>} : vector<32x2xf32>, vector<2x16xf32>, vector<32x16xf32> -> vector<32x16xf32>
    %cst_26 = arith.constant 0.000000e+00 : f32
    %33 = vector.broadcast %cst_26 : f32 to vector<32x16xf32>
    %34 = arith.subf %33, %32 : vector<32x16xf32>
    %35 = math.exp %34 : vector<32x16xf32>
    %cst_27 = arith.constant 1.000000e+00 : f32
    %36 = vector.broadcast %cst_27 : f32 to vector<32x16xf32>
    %37 = arith.addf %36, %35 : vector<32x16xf32>
    %cst_28 = arith.constant 1.000000e+00 : f32
    %38 = vector.broadcast %cst_28 : f32 to vector<32x16xf32>
    %39 = arith.divf %38, %37 : vector<32x16xf32>
    %cst_29 = arith.constant dense<0.000000e+00> : vector<32x256xf32>
    %40 = tpu.matmul %31, %0, %cst_29 {dimension_numbers = #tpu.dot_dimension_numbers<[1], [1], [0], [0], [0, 0, 1, 0], [], []>} : vector<32x16xf32>, vector<256x16xf32>, vector<32x256xf32> -> vector<32x256xf32>
    %cst_30 = arith.constant dense<0.000000e+00> : vector<32x256xf32>
    %41 = tpu.matmul %39, %1, %cst_30 {dimension_numbers = #tpu.dot_dimension_numbers<[1], [1], [0], [0], [0, 0, 1, 0], [], []>} : vector<32x16xf32>, vector<256x16xf32>, vector<32x256xf32> -> vector<32x256xf32>
    %42 = arith.mulf %40, %41 : vector<32x256xf32>
    %c0_31 = arith.constant 0 : index
    %c0_32 = arith.constant 0 : index
    %c0_33 = arith.constant 0 : index
    %43 = vector.load %arg1[%c0_31, %c0_32, %c0_33] : memref<1x32x256xf32, #tpu.memory_space<vmem>>, vector<1x32x256xf32>
    %44 = vector.shape_cast %43 : vector<1x32x256xf32> to vector<32x256xf32>
    %45 = arith.mulf %44, %42 : vector<32x256xf32>
    %c0_34 = arith.constant 0 : index
    %c0_35 = arith.constant 0 : index
    %c0_36 = arith.constant 0 : index
    %46 = vector.load %arg8[%c0_34, %c0_35, %c0_36] : memref<1x32x256xf32, #tpu.memory_space<vmem>>, vector<1x32x256xf32>
    %47 = vector.shape_cast %46 : vector<1x32x256xf32> to vector<32x256xf32>
    %48 = vector.shape_cast %45 : vector<32x256xf32> to vector<1x32x256xf32>
    tpu.vector_store %arg8[%c0_34, %c0_35, %c0_36], %48 {strides = array<i32>} : memref<1x32x256xf32, #tpu.memory_space<vmem>>, vector<1x32x256xf32>,
    return
  }
  func.func @transform_0(%arg0: i32) -> (i32, i32, i32) {
    %c0_i32 = arith.constant 0 : i32
    %c0_i32_0 = arith.constant 0 : i32
    %c0_i32_1 = arith.constant 0 : i32
    return %arg0, %c0_i32, %c0_i32_0 : i32, i32, i32
  }
  func.func @transform_1(%arg0: i32) -> (i32, i32) {
    %c0_i32 = arith.constant 0 : i32
    %c0_i32_0 = arith.constant 0 : i32
    %c0_i32_1 = arith.constant 0 : i32
    return %c0_i32, %c0_i32_0 : i32, i32
  }
  func.func @transform_2(%arg0: i32) -> (i32, i32) {
    %c0_i32 = arith.constant 0 : i32
    %c0_i32_0 = arith.constant 0 : i32
    %c0_i32_1 = arith.constant 0 : i32
    return %c0_i32, %c0_i32_0 : i32, i32
  }
  func.func @transform_3(%arg0: i32) -> (i32, i32) {
    %c0_i32 = arith.constant 0 : i32
    %c0_i32_0 = arith.constant 0 : i32
    %c0_i32_1 = arith.constant 0 : i32
    return %c0_i32, %c0_i32_0 : i32, i32
  }
  func.func @transform_4(%arg0: i32) -> (i32, i32) {
    %c0_i32 = arith.constant 0 : i32
    %c0_i32_0 = arith.constant 0 : i32
    %c0_i32_1 = arith.constant 0 : i32
    return %c0_i32, %c0_i32_0 : i32, i32
  }
  func.func @transform_5(%arg0: i32) -> (i32, i32) {
    %c0_i32 = arith.constant 0 : i32
    %c0_i32_0 = arith.constant 0 : i32
    %c0_i32_1 = arith.constant 0 : i32
    return %c0_i32, %c0_i32_0 : i32, i32
  }
  func.func @transform_6(%arg0: i32) -> (i32, i32) {
    %c0_i32 = arith.constant 0 : i32
    %c0_i32_0 = arith.constant 0 : i32
    %c0_i32_1 = arith.constant 0 : i32
    return %c0_i32, %c0_i32_0 : i32, i32
  }
  func.func @transform_7(%arg0: i32) -> (i32, i32, i32) {
    %c0_i32 = arith.constant 0 : i32
    %c0_i32_0 = arith.constant 0 : i32
    %c0_i32_1 = arith.constant 0 : i32
    return %arg0, %c0_i32, %c0_i32_0 : i32, i32, i32
  }
}

</mosaic_0001>

<llo_original>
// kernel: tpu_custom_call.1
$region0: #{tpu_custom_call.1}
  #allocation0 [shape = 'u32[]', space=smem, size = 0x4, offset = 0x4, fixed_abs, tag = 'smem constant byte address 0x4 - core index']
  #allocation1 [shape = 'u32[72,128]{1,0:T(1,128)}', space=vmem, size = 0x9000, scoped, tag = 'internal scratch']
  %s0 = inlined_call_operand.vmem [shape: f32[2,32,256], index: 0, kind: input, shape index: {}]
  %s1 = inlined_call_operand.vmem [shape: f32[256,16], index: 1, kind: input, shape index: {}]
  %s2 = inlined_call_operand.vmem [shape: f32[256,16], index: 2, kind: input, shape index: {}]
  %s3 = inlined_call_operand.vmem [shape: f32[2,32], index: 3, kind: input, shape index: {}]
  %s4 = inlined_call_operand.vmem [shape: f32[2,1], index: 4, kind: input, shape index: {}]
  %s5 = inlined_call_operand.vmem [shape: f32[32,2], index: 5, kind: input, shape index: {}]
  %s6 = inlined_call_operand.vmem [shape: f32[32,2], index: 6, kind: input, shape index: {}]
  %s7 = inlined_call_operand.hbm [shape: f32[2,32,256], index: 7, kind: output, shape index: {}]
  %s8 = sld [smem:[#allocation0]]
  $region61: #{tpu_custom_call.1} parent=0
    _
  %s10 = ssub.s32 1, %s8
  %s11 = scalar_select 0, %s10, %s8
  $region1: #{tpu_custom_call.1} parent=0
    #allocation2 [shape = 'u8[65536]{0}', space=vmem, size = 0x10000, scoped, tag = 'output window, operand 0']
    #allocation3 [shape = 's32[2]{0}', space=sflag, size = 0x8, scoped, tag = 'scoped memory for tpu_custom_call.1']
    %12 = vsyncpa [#allocation3], 0
    %s13 = scalar_lea.sflag [#allocation3], 1
    %14 = vsyncpa %s13, 0
    loop: start=0, step=1, limit=4
    $region2: #{tpu_custom_call.1} parent=1 // loop_pre_header
      _
    $region3: #{tpu_custom_call.1} parent=1 // loop_header
      %s16 = sphi 0, %s20
      %p17 = scmp.ge.s32.totalorder %s16, 4
      %s26 = sphi 0, %s28
      %s29 = sphi 0, %s26
      %s30 = sphi 0, %s29
      %s46 = sphi 0, %s30
      %s50 = sphi 0, %s50
      %s52 = sphi 0, %s50
      %s53 = sphi 0, %s52
      %s67 = sphi 0, %s53
      %s71 = sphi 0, %s71
      %s73 = sphi 0, %s71
      %s74 = sphi 0, %s73
      %s88 = sphi 0, %s74
      %s92 = sphi 0, %s92
      %s94 = sphi 0, %s92
      %s95 = sphi 0, %s94
      %s109 = sphi 0, %s95
      %s113 = sphi 0, %s113
      %s115 = sphi 0, %s113
      %s116 = sphi 0, %s115
      %s130 = sphi 0, %s116
      %s134 = sphi 0, %s134
      %s136 = sphi 0, %s134
      %s137 = sphi 0, %s136
      %s151 = sphi 0, %s137
      %s155 = sphi 0, %s155
      %s157 = sphi 0, %s155
      %s158 = sphi 0, %s157
      %s172 = sphi 0, %s158
      %s178 = sphi 0, %s180
      %s181 = sphi 0, %s178
      %s182 = sphi 0, %s181
      %s198 = sphi 0, %s182
    $region4: #{tpu_custom_call.1} parent=1 // loop_header_branch
      %19 = sbr.rel (%p17) target = $region8
    $region5: #{tpu_custom_call.1} parent=1 // loop_body
      %s21 = ssub.s32 %s16, 1
      %s22 = ssub.s32 %s16, 2
      %s23 = sadd.s32 %s16, 1
      %s24 = ssub.s32 %s16, %s23
      %p25 = scmp.eq.s32.totalorder %s24, 0
      %s27 = sadd.s32 %s26, 1
      %s28 = scalar_select %p25, %s26, %s27
      %p31 = pneg %p25
      %p32 = scmp.eq.s32.totalorder %s16, 1
      %p33 = por %p31, %p32
      %p34 = scmp.ne.s32.totalorder %s26, %s29
      %p35 = scmp.eq.s32.totalorder %s16, 0
      %p36 = por %p34, %p35
      %p37 = scmp.ne.s32.totalorder %s26, %s29
      %p38 = scmp.eq.s32.totalorder %s21, 1
      %p39 = por %p37, %p38
      %p40 = scmp.ne.s32.totalorder %s29, %s30
      %p41 = scmp.eq.s32.totalorder %s21, 0
      %p42 = por %p40, %p41
      %p43 = scmp.ne.s32.totalorder %s29, %s30
      %p44 = scmp.eq.s32.totalorder %s22, 1
      %p45 = por %p43, %p44
      %p47 = scmp.ne.s32.totalorder %s30, %s46
      %p48 = scmp.eq.s32.totalorder %s22, 0
      %p49 = por %p47, %p48
      %s51 = sadd.s32 %s50, 1
      %p54 = scmp.eq.s32.totalorder %s16, 1
      %p55 = scmp.ne.s32.totalorder %s50, %s52
      %p56 = scmp.eq.s32.totalorder %s16, 0
      %p57 = por %p55, %p56
      %p58 = scmp.ne.s32.totalorder %s50, %s52
      %p59 = scmp.eq.s32.totalorder %s21, 1
      %p60 = por %p58, %p59
      %p61 = scmp.ne.s32.totalorder %s52, %s53
      %p62 = scmp.eq.s32.totalorder %s21, 0
      %p63 = por %p61, %p62
      %p64 = scmp.ne.s32.totalorder %s52, %s53
      %p65 = scmp.eq.s32.totalorder %s22, 1
      %p66 = por %p64, %p65
      %p68 = scmp.ne.s32.totalorder %s53, %s67
      %p69 = scmp.eq.s32.totalorder %s22, 0
      %p70 = por %p68, %p69
      %s72 = sadd.s32 %s71, 1
      %p75 = scmp.eq.s32.totalorder %s16, 1
      %p76 = scmp.ne.s32.totalorder %s71, %s73
      %p77 = scmp.eq.s32.totalorder %s16, 0
      %p78 = por %p76, %p77
      %p79 = scmp.ne.s32.totalorder %s71, %s73
      %p80 = scmp.eq.s32.totalorder %s21, 1
      %p81 = por %p79, %p80
      %p82 = scmp.ne.s32.totalorder %s73, %s74
      %p83 = scmp.eq.s32.totalorder %s21, 0
      %p84 = por %p82, %p83
      %p85 = scmp.ne.s32.totalorder %s73, %s74
      %p86 = scmp.eq.s32.totalorder %s22, 1
      %p87 = por %p85, %p86
      %p89 = scmp.ne.s32.totalorder %s74, %s88
      %p90 = scmp.eq.s32.totalorder %s22, 0
      %p91 = por %p89, %p90
      %s93 = sadd.s32 %s92, 1
      %p96 = scmp.eq.s32.totalorder %s16, 1
      %p97 = scmp.ne.s32.totalorder %s92, %s94
      %p98 = scmp.eq.s32.totalorder %s16, 0
      %p99 = por %p97, %p98
      %p100 = scmp.ne.s32.totalorder %s92, %s94
      %p101 = scmp.eq.s32.totalorder %s21, 1
      %p102 = por %p100, %p101
      %p103 = scmp.ne.s32.totalorder %s94, %s95
      %p104 = scmp.eq.s32.totalorder %s21, 0
      %p105 = por %p103, %p104
      %p106 = scmp.ne.s32.totalorder %s94, %s95
      %p107 = scmp.eq.s32.totalorder %s22, 1
      %p108 = por %p106, %p107
      %p110 = scmp.ne.s32.totalorder %s95, %s109
      %p111 = scmp.eq.s32.totalorder %s22, 0
      %p112 = por %p110, %p111
      %s114 = sadd.s32 %s113, 1
      %p117 = scmp.eq.s32.totalorder %s16, 1
      %p118 = scmp.ne.s32.totalorder %s113, %s115
      %p119 = scmp.eq.s32.totalorder %s16, 0
      %p120 = por %p118, %p119
      %p121 = scmp.ne.s32.totalorder %s113, %s115
      %p122 = scmp.eq.s32.totalorder %s21, 1
      %p123 = por %p121, %p122
      %p124 = scmp.ne.s32.totalorder %s115, %s116
      %p125 = scmp.eq.s32.totalorder %s21, 0
      %p126 = por %p124, %p125
      %p127 = scmp.ne.s32.totalorder %s115, %s116
      %p128 = scmp.eq.s32.totalorder %s22, 1
      %p129 = por %p127, %p128
      %p131 = scmp.ne.s32.totalorder %s116, %s130
      %p132 = scmp.eq.s32.totalorder %s22, 0
      %p133 = por %p131, %p132
      %s135 = sadd.s32 %s134, 1
      %p138 = scmp.eq.s32.totalorder %s16, 1
      %p139 = scmp.ne.s32.totalorder %s134, %s136
      %p140 = scmp.eq.s32.totalorder %s16, 0
      %p141 = por %p139, %p140
      %p142 = scmp.ne.s32.totalorder %s134, %s136
      %p143 = scmp.eq.s32.totalorder %s21, 1
      %p144 = por %p142, %p143
      %p145 = scmp.ne.s32.totalorder %s136, %s137
      %p146 = scmp.eq.s32.totalorder %s21, 0
      %p147 = por %p145, %p146
      %p148 = scmp.ne.s32.totalorder %s136, %s137
      %p149 = scmp.eq.s32.totalorder %s22, 1
      %p150 = por %p148, %p149
      %p152 = scmp.ne.s32.totalorder %s137, %s151
      %p153 = scmp.eq.s32.totalorder %s22, 0
      %p154 = por %p152, %p153
      %s156 = sadd.s32 %s155, 1
      %p159 = scmp.eq.s32.totalorder %s16, 1
      %p160 = scmp.ne.s32.totalorder %s155, %s157
      %p161 = scmp.eq.s32.totalorder %s16, 0
      %p162 = por %p160, %p161
      %p163 = scmp.ne.s32.totalorder %s155, %s157
      %p164 = scmp.eq.s32.totalorder %s21, 1
      %p165 = por %p163, %p164
      %p166 = scmp.ne.s32.totalorder %s157, %s158
      %p167 = scmp.eq.s32.totalorder %s21, 0
      %p168 = por %p166, %p167
      %p169 = scmp.ne.s32.totalorder %s157, %s158
      %p170 = scmp.eq.s32.totalorder %s22, 1
      %p171 = por %p169, %p170
      %p173 = scmp.ne.s32.totalorder %s158, %s172
      %p174 = scmp.eq.s32.totalorder %s22, 0
      %p175 = por %p173, %p174
      %s176 = ssub.s32 %s16, %s23
      %p177 = scmp.eq.s32.totalorder %s176, 0
      %s179 = sadd.s32 %s178, 1
      %s180 = scalar_select %p177, %s178, %s179
      %p183 = pneg %p177
      %p184 = scmp.eq.s32.totalorder %s16, 1
      %p185 = por %p183, %p184
      %p186 = scmp.ne.s32.totalorder %s178, %s181
      %p187 = scmp.eq.s32.totalorder %s16, 0
      %p188 = por %p186, %p187
      %p189 = scmp.ne.s32.totalorder %s178, %s181
      %p190 = scmp.eq.s32.totalorder %s21, 1
      %p191 = por %p189, %p190
      %p192 = scmp.ne.s32.totalorder %s181, %s182
      %p193 = scmp.eq.s32.totalorder %s21, 0
      %p194 = por %p192, %p193
      %p195 = scmp.ne.s32.totalorder %s181, %s182
      %p196 = scmp.eq.s32.totalorder %s22, 1
      %p197 = por %p195, %p196
      %p199 = scmp.ne.s32.totalorder %s182, %s198
      %p200 = scmp.eq.s32.totalorder %s22, 0
      %p201 = por %p199, %p200
      %p202 = scmp.le.s32.totalorder 1, %s16
      %p203 = scmp.lt.s32.totalorder %s16, 3
      %p204 = pnand %p202, %p203
      %p205 = pneg %p204
      // Predicated region
      $region9: #{tpu_custom_call.1} parent=5 // pred_check
        _
      $region10: #{tpu_custom_call.1} parent=5 // pred_check_branch
        %207 = sbr.rel (%p204) target = $region12
      $region11: #{tpu_custom_call.1} parent=5 // pred_region
        %s208 = ssub.s32 %s16, 1
        // Predicated region
        $region13: #{tpu_custom_call.1} parent=11 // pred_check
          %p209 = pneg %p63
        $region14: #{tpu_custom_call.1} parent=11 // pred_check_branch
          %211 = sbr.rel (%p209) target = $region16
        $region15: #{tpu_custom_call.1} parent=11 // pred_region
          _
        $region16: #{tpu_custom_call.1} parent=11 // pred_fallthru
          _
        // Predicated region
        $region17: #{tpu_custom_call.1} parent=11 // pred_check
          %p212 = pneg %p84
        $region18: #{tpu_custom_call.1} parent=11 // pred_check_branch
          %214 = sbr.rel (%p212) target = $region20
        $region19: #{tpu_custom_call.1} parent=11 // pred_region
          _
        $region20: #{tpu_custom_call.1} parent=11 // pred_fallthru
          _
        // Predicated region
        $region21: #{tpu_custom_call.1} parent=11 // pred_check
          %p215 = pneg %p105
        $region22: #{tpu_custom_call.1} parent=11 // pred_check_branch
          %217 = sbr.rel (%p215) target = $region24
        $region23: #{tpu_custom_call.1} parent=11 // pred_region
          _
        $region24: #{tpu_custom_call.1} parent=11 // pred_fallthru
          _
        // Predicated region
        $region25: #{tpu_custom_call.1} parent=11 // pred_check
          %p218 = pneg %p126
        $region26: #{tpu_custom_call.1} parent=11 // pred_check_branch
          %220 = sbr.rel (%p218) target = $region28
        $region27: #{tpu_custom_call.1} parent=11 // pred_region
          _
        $region28: #{tpu_custom_call.1} parent=11 // pred_fallthru
          _
        // Predicated region
        $region29: #{tpu_custom_call.1} parent=11 // pred_check
          %p221 = pneg %p147
        $region30: #{tpu_custom_call.1} parent=11 // pred_check_branch
          %223 = sbr.rel (%p221) target = $region32
        $region31: #{tpu_custom_call.1} parent=11 // pred_region
          _
        $region32: #{tpu_custom_call.1} parent=11 // pred_fallthru
          _
        // Predicated region
        $region33: #{tpu_custom_call.1} parent=11 // pred_check
          %p224 = pneg %p168
        $region34: #{tpu_custom_call.1} parent=11 // pred_check_branch
          %226 = sbr.rel (%p224) target = $region36
        $region35: #{tpu_custom_call.1} parent=11 // pred_region
          _
        $region36: #{tpu_custom_call.1} parent=11 // pred_fallthru
          _
      $region12: #{tpu_custom_call.1} parent=5 // pred_fallthru
        _
      %p227 = scmp.lt.s32.totalorder %s16, 2
      // Predicated region
      $region37: #{tpu_custom_call.1} parent=5 // pred_check
        %p228 = pneg %p227
      $region38: #{tpu_custom_call.1} parent=5 // pred_check_branch
        %230 = sbr.rel (%p228) target = $region40
      $region39: #{tpu_custom_call.1} parent=5 // pred_region
        // Predicated region
        $region41: #{tpu_custom_call.1} parent=39 // pred_check
          %p231 = pneg %p36
        $region42: #{tpu_custom_call.1} parent=39 // pred_check_branch
          %233 = sbr.rel (%p231) target = $region44
        $region43: #{tpu_custom_call.1} parent=39 // pred_region
          %p234 = scmp.lt.s32.totalorder %s16, 1
          %s235 = scalar_select %p234, %s16, 1
          %s236 = smul.addr %s235, 8
          %s237 = smul.addr %s236, 8
          %s238 = scalar_lea.vmem %s0, %s237
        $region44: #{tpu_custom_call.1} parent=39 // pred_fallthru
          _
      $region40: #{tpu_custom_call.1} parent=5 // pred_fallthru
        _
      %p239 = scmp.le.s32.totalorder 1, %s16
      %p240 = scmp.lt.s32.totalorder %s16, 3
      %p241 = pnand %p239, %p240
      %p242 = pneg %p241
      // Predicated region
      $region45: #{tpu_custom_call.1} parent=5 // pred_check
        _
      $region46: #{tpu_custom_call.1} parent=5 // pred_check_branch
        %244 = sbr.rel (%p241) target = $region48
      $region47: #{tpu_custom_call.1} parent=5 // pred_region
        %s245 = ssub.s32 %s16, 1
        %p246 = scmp.lt.s32.totalorder %s21, 1
        %s247 = scalar_select %p246, %s21, 1
        %s248 = smul.addr %s247, 8
        %s249 = smul.addr %s248, 8
        %s250 = scalar_lea.vmem %s0, %s249
        %p251 = pneg %p42
        %p252 = pneg %p39
        %p253 = pneg %p63
        %p254 = pneg %p60
        %p255 = pneg %p84
        %p256 = pneg %p81
        %p257 = pneg %p105
        %p258 = pneg %p102
        %p259 = pneg %p126
        %p260 = pneg %p123
        %p261 = pneg %p147
        %p262 = pneg %p144
        %p263 = pneg %p168
        %p264 = pneg %p165
        %p265 = pneg %p194
        %p266 = pneg %p191
        %s267 = sand.u32 %s181, 1
        %s268 = scalar_lea.sflag [#allocation3], %s267
        %s269 = sand.u32 %s181, 1
        %s270 = smul.addr %s269, 64
        %s271 = scalar_lea.vmem [#allocation2], %s270
        %p272 = scmp.lt.s32.totalorder %s21, 1
        %s273 = scalar_select %p272, %s21, 1
        %s274 = smul.addr %s273, 8
        %s275 = smul.addr %s274, 8
        %s276 = scalar_lea.vmem %s0, %s275
        %v277 = vld [vmem:[%s1] sm:$0xff]
        %v278 = vld [vmem:[%s1 + $0x8] sm:$0xff]
        %v279 = vld [vmem:[%s1 + $0x10] sm:$0xff]
        %v280 = vld [vmem:[%s1 + $0x18] sm:$0xff]
        %v281 = vld [vmem:[%s1 + $0x20] sm:$0xff]
        %v282 = vld [vmem:[%s1 + $0x28] sm:$0xff]
        %v283 = vld [vmem:[%s1 + $0x30] sm:$0xff]
        %v284 = vld [vmem:[%s1 + $0x38] sm:$0xff]
        %v285 = vld [vmem:[%s1 + $0x40] sm:$0xff]
        %v286 = vld [vmem:[%s1 + $0x48] sm:$0xff]
        %v287 = vld [vmem:[%s1 + $0x50] sm:$0xff]
        %v288 = vld [vmem:[%s1 + $0x58] sm:$0xff]
        %v289 = vld [vmem:[%s1 + $0x60] sm:$0xff]
        %v290 = vld [vmem:[%s1 + $0x68] sm:$0xff]
        %v291 = vld [vmem:[%s1 + $0x70] sm:$0xff]
        %v292 = vld [vmem:[%s1 + $0x78] sm:$0xff]
        %v293 = vld [vmem:[%s1 + $0x80] sm:$0xff]
        %v294 = vld [vmem:[%s1 + $0x88] sm:$0xff]
        %v295 = vld [vmem:[%s1 + $0x90] sm:$0xff]
        %v296 = vld [vmem:[%s1 + $0x98] sm:$0xff]
        %v297 = vld [vmem:[%s1 + $0xa0] sm:$0xff]
        %v298 = vld [vmem:[%s1 + $0xa8] sm:$0xff]
        %v299 = vld [vmem:[%s1 + $0xb0] sm:$0xff]
        %v300 = vld [vmem:[%s1 + $0xb8] sm:$0xff]
        %v301 = vld [vmem:[%s1 + $0xc0] sm:$0xff]
        %v302 = vld [vmem:[%s1 + $0xc8] sm:$0xff]
        %v303 = vld [vmem:[%s1 + $0xd0] sm:$0xff]
        %v304 = vld [vmem:[%s1 + $0xd8] sm:$0xff]
        %v305 = vld [vmem:[%s1 + $0xe0] sm:$0xff]
        %v306 = vld [vmem:[%s1 + $0xe8] sm:$0xff]
        %v307 = vld [vmem:[%s1 + $0xf0] sm:$0xff]
        %v308 = vld [vmem:[%s1 + $0xf8] sm:$0xff]
        %v309 = vld [vmem:[%s2] sm:$0xff]
        %v310 = vld [vmem:[%s2 + $0x8] sm:$0xff]
        %v311 = vld [vmem:[%s2 + $0x10] sm:$0xff]
        %v312 = vld [vmem:[%s2 + $0x18] sm:$0xff]
        %v313 = vld [vmem:[%s2 + $0x20] sm:$0xff]
        %v314 = vld [vmem:[%s2 + $0x28] sm:$0xff]
        %v315 = vld [vmem:[%s2 + $0x30] sm:$0xff]
        %v316 = vld [vmem:[%s2 + $0x38] sm:$0xff]
        %v317 = vld [vmem:[%s2 + $0x40] sm:$0xff]
        %v318 = vld [vmem:[%s2 + $0x48] sm:$0xff]
        %v319 = vld [vmem:[%s2 + $0x50] sm:$0xff]
        %v320 = vld [vmem:[%s2 + $0x58] sm:$0xff]
        %v321 = vld [vmem:[%s2 + $0x60] sm:$0xff]
        %v322 = vld [vmem:[%s2 + $0x68] sm:$0xff]
        %v323 = vld [vmem:[%s2 + $0x70] sm:$0xff]
        %v324 = vld [vmem:[%s2 + $0x78] sm:$0xff]
        %v325 = vld [vmem:[%s2 + $0x80] sm:$0xff]
        %v326 = vld [vmem:[%s2 + $0x88] sm:$0xff]
        %v327 = vld [vmem:[%s2 + $0x90] sm:$0xff]
        %v328 = vld [vmem:[%s2 + $0x98] sm:$0xff]
        %v329 = vld [vmem:[%s2 + $0xa0] sm:$0xff]
        %v330 = vld [vmem:[%s2 + $0xa8] sm:$0xff]
        %v331 = vld [vmem:[%s2 + $0xb0] sm:$0xff]
        %v332 = vld [vmem:[%s2 + $0xb8] sm:$0xff]
        %v333 = vld [vmem:[%s2 + $0xc0] sm:$0xff]
        %v334 = vld [vmem:[%s2 + $0xc8] sm:$0xff]
        %v335 = vld [vmem:[%s2 + $0xd0] sm:$0xff]
        %v336 = vld [vmem:[%s2 + $0xd8] sm:$0xff]
        %v337 = vld [vmem:[%s2 + $0xe0] sm:$0xff]
        %v338 = vld [vmem:[%s2 + $0xe8] sm:$0xff]
        %v339 = vld [vmem:[%s2 + $0xf0] sm:$0xff]
        %v340 = vld [vmem:[%s2 + $0xf8] sm:$0xff]
        %v341 = vld [vmem:[%s3] sm:$0x3]
        %v342 = vld [vmem:[%s4] sm:$0x3]
        %v343 = vld [vmem:[%s5] sm:$0xff]
        %v344 = vld [vmem:[%s5 + $0x8] sm:$0xff]
        %v345 = vld [vmem:[%s5 + $0x10] sm:$0xff]
        %v346 = vld [vmem:[%s5 + $0x18] sm:$0xff]
        %v347 = vld [vmem:[%s6] sm:$0xff]
        %v348 = vld [vmem:[%s6 + $0x8] sm:$0xff]
        %v349 = vld [vmem:[%s6 + $0x10] sm:$0xff]
        %v350 = vld [vmem:[%s6 + $0x18] sm:$0xff]
        %v351 = vld [vmem:[%s276] sm:$0xff]
        %v352 = vld [vmem:[%s276 + $0x8] sm:$0xff]
        %v353 = vld [vmem:[%s276 + $0x10] sm:$0xff]
        %v354 = vld [vmem:[%s276 + $0x18] sm:$0xff]
        %v355 = vld [vmem:[%s276 + $0x20] sm:$0xff]
        %v356 = vld [vmem:[%s276 + $0x28] sm:$0xff]
        %v357 = vld [vmem:[%s276 + $0x30] sm:$0xff]
        %v358 = vld [vmem:[%s276 + $0x38] sm:$0xff]
        %359 = vmatpush.msra.mxu0 %v292
        %360 = vmatpush.msra.mxu0 %v291
        %361 = vmatpush.msra.mxu0 %v290
        %362 = vmatpush.msra.mxu0 %v289
        %363 = vmatpush.msra.mxu0 %v288
        %364 = vmatpush.msra.mxu0 %v287
        %365 = vmatpush.msra.mxu0 %v286
        %366 = vmatpush.msra.mxu0 %v285
        %367 = vmatpush.msra.mxu0 %v284
        %368 = vmatpush.msra.mxu0 %v283
        %369 = vmatpush.msra.mxu0 %v282
        %370 = vmatpush.msra.mxu0 %v281
        %371 = vmatpush.msra.mxu0 %v280
        %372 = vmatpush.msra.mxu0 %v279
        %373 = vmatpush.msra.mxu0 %v278
        %374 = vmatpush.msra.mxu0 %v277
        %375 = vmatmul.f32.gmra.mxu0 %v351
        %v376 = vpop.f32.mrf.mxu0
        %v377 = vadd.f32 0.0, %v376
        %378 = vmatmul.f32.gmra.mxu0 %v353
        %v379 = vpop.f32.mrf.mxu0
        %v380 = vadd.f32 0.0, %v379
        %381 = vmatmul.f32.gmra.mxu0 %v355
        %v382 = vpop.f32.mrf.mxu0
        %v383 = vadd.f32 0.0, %v382
        %384 = vmatmul.f32.gmra.mxu0 %v357
        %v385 = vpop.f32.mrf.mxu0
        %v386 = vadd.f32 0.0, %v385
        %387 = vdwg.mxu0
        %388 = vmatpush.msra.mxu0 %v308
        %389 = vmatpush.msra.mxu0 %v307
        %390 = vmatpush.msra.mxu0 %v306
        %391 = vmatpush.msra.mxu0 %v305
        %392 = vmatpush.msra.mxu0 %v304
        %393 = vmatpush.msra.mxu0 %v303
        %394 = vmatpush.msra.mxu0 %v302
        %395 = vmatpush.msra.mxu0 %v301
        %396 = vmatpush.msra.mxu0 %v300
        %397 = vmatpush.msra.mxu0 %v299
        %398 = vmatpush.msra.mxu0 %v298
        %399 = vmatpush.msra.mxu0 %v297
        %400 = vmatpush.msra.mxu0 %v296
        %401 = vmatpush.msra.mxu0 %v295
        %402 = vmatpush.msra.mxu0 %v294
        %403 = vmatpush.msra.mxu0 %v293
        %404 = vmatmul.f32.gmra.mxu0 %v352
        %v405 = vpop.f32.mrf.mxu0
        %v406 = vadd.f32 %v377, %v405
        %407 = vmatmul.f32.gmra.mxu0 %v354
        %v408 = vpop.f32.mrf.mxu0
        %v409 = vadd.f32 %v380, %v408
        %410 = vmatmul.f32.gmra.mxu0 %v356
        %v411 = vpop.f32.mrf.mxu0
        %v412 = vadd.f32 %v383, %v411
        %413 = vmatmul.f32.gmra.mxu0 %v358
        %v414 = vpop.f32.mrf.mxu0
        %v415 = vadd.f32 %v386, %v414
        %416 = vdwg.mxu0
        %v417 = vmul.f32 %v406, 0.0625
        %v418 = vmul.f32 %v409, 0.0625
        %v419 = vmul.f32 %v412, 0.0625
        %v420 = vmul.f32 %v415, 0.0625
        %421 = vmatpush.msra.mxu0 %v324
        %422 = vmatpush.msra.mxu0 %v323
        %423 = vmatpush.msra.mxu0 %v322
        %424 = vmatpush.msra.mxu0 %v321
        %425 = vmatpush.msra.mxu0 %v320
        %426 = vmatpush.msra.mxu0 %v319
        %427 = vmatpush.msra.mxu0 %v318
        %428 = vmatpush.msra.mxu0 %v317
        %429 = vmatpush.msra.mxu0 %v316
        %430 = vmatpush.msra.mxu0 %v315
        %431 = vmatpush.msra.mxu0 %v314
        %432 = vmatpush.msra.mxu0 %v313
        %433 = vmatpush.msra.mxu0 %v312
        %434 = vmatpush.msra.mxu0 %v311
        %435 = vmatpush.msra.mxu0 %v310
        %436 = vmatpush.msra.mxu0 %v309
        %437 = vmatmul.f32.gmra.mxu0 %v351
        %v438 = vpop.f32.mrf.mxu0
        %v439 = vadd.f32 0.0, %v438
        %440 = vmatmul.f32.gmra.mxu0 %v353
        %v441 = vpop.f32.mrf.mxu0
        %v442 = vadd.f32 0.0, %v441
        %443 = vmatmul.f32.gmra.mxu0 %v355
        %v444 = vpop.f32.mrf.mxu0
        %v445 = vadd.f32 0.0, %v444
        %446 = vmatmul.f32.gmra.mxu0 %v357
        %v447 = vpop.f32.mrf.mxu0
        %v448 = vadd.f32 0.0, %v447
        %449 = vdwg.mxu0
        %450 = vmatpush.msra.mxu0 %v340
        %451 = vmatpush.msra.mxu0 %v339
        %452 = vmatpush.msra.mxu0 %v338
        %453 = vmatpush.msra.mxu0 %v337
        %454 = vmatpush.msra.mxu0 %v336
        %455 = vmatpush.msra.mxu0 %v335
        %456 = vmatpush.msra.mxu0 %v334
        %457 = vmatpush.msra.mxu0 %v333
        %458 = vmatpush.msra.mxu0 %v332
        %459 = vmatpush.msra.mxu0 %v331
        %460 = vmatpush.msra.mxu0 %v330
        %461 = vmatpush.msra.mxu0 %v329
        %462 = vmatpush.msra.mxu0 %v328
        %463 = vmatpush.msra.mxu0 %v327
        %464 = vmatpush.msra.mxu0 %v326
        %465 = vmatpush.msra.mxu0 %v325
        %466 = vmatmul.f32.gmra.mxu0 %v352
        %v467 = vpop.f32.mrf.mxu0
        %v468 = vadd.f32 %v439, %v467
        %469 = vmatmul.f32.gmra.mxu0 %v354
        %v470 = vpop.f32.mrf.mxu0
        %v471 = vadd.f32 %v442, %v470
        %472 = vmatmul.f32.gmra.mxu0 %v356
        %v473 = vpop.f32.mrf.mxu0
        %v474 = vadd.f32 %v445, %v473
        %475 = vmatmul.f32.gmra.mxu0 %v358
        %v476 = vpop.f32.mrf.mxu0
        %v477 = vadd.f32 %v448, %v476
        %478 = vdwg.mxu0
        %v479 = vmul.f32 %v468, 0.0625
        %v480 = vmul.f32 %v471, 0.0625
        %v481 = vmul.f32 %v474, 0.0625
        %v482 = vmul.f32 %v477, 0.0625
        %484 = vset.pattern.permute.xlu0 0
        %485 = vperm.xlu0 %484, %v342
        %v486 = vpop.permute.xlu0 %485
        %vm488 = vcmask 261120
        %v490 = vsel %vm488, %v341, 0
        %492 = vmatpush.msra.mxu0 0.0
        %493 = vmatpush.msra.mxu0 0.0
        %494 = vmatpush.msra.mxu0 0.0
        %495 = vmatpush.msra.mxu0 0.0
        %496 = vmatpush.msra.mxu0 0.0
        %497 = vmatpush.msra.mxu0 0.0
        %498 = vmatpush.msra.mxu0 0.0
        %499 = vmatpush.msra.mxu0 0.0
        %500 = vmatpush.msra.mxu0 0.0
        %501 = vmatpush.msra.mxu0 0.0
        %502 = vmatpush.msra.mxu0 0.0
        %503 = vmatpush.msra.mxu0 0.0
        %504 = vmatpush.msra.mxu0 %v420
        %505 = vmatpush.msra.mxu0 %v419
        %506 = vmatpush.msra.mxu0 %v418
        %507 = vmatpush.msra.mxu0 %v417
        %508 = vmatmul.f32.gmra.mxu0 %v490
        %v509 = vpop.f32.mrf.mxu0
        %v510 = vadd.f32 %v486, %v509
        %511 = vdwg.mxu0
        %v512 = vmax.f32 %v510, 0.0
        %513 = vmatpush.msra.mxu0 0.0
        %514 = vmatpush.msra.mxu0 0.0
        %515 = vmatpush.msra.mxu0 0.0
        %516 = vmatpush.msra.mxu0 0.0
        %517 = vmatpush.msra.mxu0 0.0
        %518 = vmatpush.msra.mxu0 0.0
        %519 = vmatpush.msra.mxu0 0.0
        %520 = vmatpush.msra.mxu0 0.0
        %521 = vmatpush.msra.mxu0 0.0
        %522 = vmatpush.msra.mxu0 0.0
        %523 = vmatpush.msra.mxu0 0.0
        %524 = vmatpush.msra.mxu0 0.0
        %525 = vmatpush.msra.mxu0 %v482
        %526 = vmatpush.msra.mxu0 %v481
        %527 = vmatpush.msra.mxu0 %v480
        %528 = vmatpush.msra.mxu0 %v479
        %529 = vmatmul.f32.gmra.mxu0 %v490
        %v530 = vpop.f32.mrf.mxu0
        %v531 = vadd.f32 %v486, %v530
        %532 = vdwg.mxu0
        %v533 = vmax.f32 %v531, 0.0
        %vm534 = vcmask 15360
        %v536 = vsel %vm534, %v343, 0
        %v539 = vsel %vm534, %v344, 0
        %v542 = vsel %vm534, %v345, 0
        %v545 = vsel %vm534, %v346, 0
        %vm547 = vcmask 1041408
        %v549 = vsel %vm547, %v512, 0
        %551 = vmatpush.msra.mxu0 0.0
        %552 = vmatpush.msra.mxu0 0.0
        %553 = vmatpush.msra.mxu0 0.0
        %554 = vmatpush.msra.mxu0 0.0
        %555 = vmatpush.msra.mxu0 0.0
        %556 = vmatpush.msra.mxu0 0.0
        %557 = vmatpush.msra.mxu0 0.0
        %558 = vmatpush.msra.mxu0 0.0
        %559 = vmatpush.msra.mxu0 0.0
        %560 = vmatpush.msra.mxu0 0.0
        %561 = vmatpush.msra.mxu0 0.0
        %562 = vmatpush.msra.mxu0 0.0
        %563 = vmatpush.msra.mxu0 0.0
        %564 = vmatpush.msra.mxu0 0.0
        %565 = vmatpush.msra.mxu0 0.0
        %566 = vmatpush.msra.mxu0 %v549
        %567 = vmatmul.f32.gmra.mxu0 %v536
        %v568 = vpop.f32.mrf.mxu0
        %v569 = vadd.f32 0.0, %v568
        %570 = vmatmul.f32.gmra.mxu0 %v539
        %v571 = vpop.f32.mrf.mxu0
        %v572 = vadd.f32 0.0, %v571
        %573 = vmatmul.f32.gmra.mxu0 %v542
        %v574 = vpop.f32.mrf.mxu0
        %v575 = vadd.f32 0.0, %v574
        %576 = vmatmul.f32.gmra.mxu0 %v545
        %v577 = vpop.f32.mrf.mxu0
        %v578 = vadd.f32 0.0, %v577
        %579 = vdwg.mxu0
        %v580 = vsub.f32 0.0, %v569
        %v581 = vsub.f32 0.0, %v572
        %v582 = vsub.f32 0.0, %v575
        %v583 = vsub.f32 0.0, %v578
        %v584 = vmul.f32 %v580, 1.442695
        %v585 = vpow.pop %v584
        %v586 = vmul.f32 %v581, 1.442695
        %v587 = vpow.pop %v586
        %v588 = vmul.f32 %v582, 1.442695
        %v589 = vpow.pop %v588
        %v590 = vmul.f32 %v583, 1.442695
        %v591 = vpow.pop %v590
        %v592 = vadd.f32 %v585, 1.0
        %v593 = vadd.f32 %v587, 1.0
        %v594 = vadd.f32 %v589, 1.0
        %v595 = vadd.f32 %v591, 1.0
        %v596 = vrcp.pop %v592
        %v597 = vmul.f32 %v592, %v596
        %v598 = vsub.f32 1.0, %v597
        %v599 = vmul.f32 %v596, %v598
        %v600 = vadd.f32 %v596, %v599
        %vm601 = vweird.f32 %v592
        %vm602 = vweird.f32 %v596
        %vm603 = vmor %vm601, %vm602
        %v604 = vsel %vm603, %v596, %v600
        %v605 = vand.u32 2147483647, %v592
        %vm606 = vcmp.eq.f32.partialorder %v605, 8.507059e+37
        %v607 = vand.u32 %v592, 2147483648
        %v608 = vor.u32 1.1754944e-38, %v607
        %v609 = vsel %vm606, %v608, %v604
        %v610 = vmul.f32 1.0, %v609
        %v611 = vrcp.pop %v593
        %v612 = vmul.f32 %v593, %v611
        %v613 = vsub.f32 1.0, %v612
        %v614 = vmul.f32 %v611, %v613
        %v615 = vadd.f32 %v611, %v614
        %vm616 = vweird.f32 %v593
        %vm617 = vweird.f32 %v611
        %vm618 = vmor %vm616, %vm617
        %v619 = vsel %vm618, %v611, %v615
        %v620 = vand.u32 2147483647, %v593
        %vm621 = vcmp.eq.f32.partialorder %v620, 8.507059e+37
        %v622 = vand.u32 %v593, 2147483648
        %v623 = vor.u32 1.1754944e-38, %v622
        %v624 = vsel %vm621, %v623, %v619
        %v625 = vmul.f32 1.0, %v624
        %v626 = vrcp.pop %v594
        %v627 = vmul.f32 %v594, %v626
        %v628 = vsub.f32 1.0, %v627
        %v629 = vmul.f32 %v626, %v628
        %v630 = vadd.f32 %v626, %v629
        %vm631 = vweird.f32 %v594
        %vm632 = vweird.f32 %v626
        %vm633 = vmor %vm631, %vm632
        %v634 = vsel %vm633, %v626, %v630
        %v635 = vand.u32 2147483647, %v594
        %vm636 = vcmp.eq.f32.partialorder %v635, 8.507059e+37
        %v637 = vand.u32 %v594, 2147483648
        %v638 = vor.u32 1.1754944e-38, %v637
        %v639 = vsel %vm636, %v638, %v634
        %v640 = vmul.f32 1.0, %v639
        %v641 = vrcp.pop %v595
        %v642 = vmul.f32 %v595, %v641
        %v643 = vsub.f32 1.0, %v642
        %v644 = vmul.f32 %v641, %v643
        %v645 = vadd.f32 %v641, %v644
        %vm646 = vweird.f32 %v595
        %vm647 = vweird.f32 %v641
        %vm648 = vmor %vm646, %vm647
        %v649 = vsel %vm648, %v641, %v645
        %v650 = vand.u32 2147483647, %v595
        %vm651 = vcmp.eq.f32.partialorder %v650, 8.507059e+37
        %v652 = vand.u32 %v595, 2147483648
        %v653 = vor.u32 1.1754944e-38, %v652
        %v654 = vsel %vm651, %v653, %v649
        %v655 = vmul.f32 1.0, %v654
        %v657 = vsel %vm534, %v347, 0
        %v660 = vsel %vm534, %v348, 0
        %v663 = vsel %vm534, %v349, 0
        %v666 = vsel %vm534, %v350, 0
        %v669 = vsel %vm547, %v533, 0
        %671 = vmatpush.msra.mxu0 0.0
        %672 = vmatpush.msra.mxu0 0.0
        %673 = vmatpush.msra.mxu0 0.0
        %674 = vmatpush.msra.mxu0 0.0
        %675 = vmatpush.msra.mxu0 0.0
        %676 = vmatpush.msra.mxu0 0.0
        %677 = vmatpush.msra.mxu0 0.0
        %678 = vmatpush.msra.mxu0 0.0
        %679 = vmatpush.msra.mxu0 0.0
        %680 = vmatpush.msra.mxu0 0.0
        %681 = vmatpush.msra.mxu0 0.0
        %682 = vmatpush.msra.mxu0 0.0
        %683 = vmatpush.msra.mxu0 0.0
        %684 = vmatpush.msra.mxu0 0.0
        %685 = vmatpush.msra.mxu0 0.0
        %686 = vmatpush.msra.mxu0 %v669
        %687 = vmatmul.f32.gmra.mxu0 %v657
        %v688 = vpop.f32.mrf.mxu0
        %v689 = vadd.f32 0.0, %v688
        %690 = vmatmul.f32.gmra.mxu0 %v660
        %v691 = vpop.f32.mrf.mxu0
        %v692 = vadd.f32 0.0, %v691
        %693 = vmatmul.f32.gmra.mxu0 %v663
        %v694 = vpop.f32.mrf.mxu0
        %v695 = vadd.f32 0.0, %v694
        %696 = vmatmul.f32.gmra.mxu0 %v666
        %v697 = vpop.f32.mrf.mxu0
        %v698 = vadd.f32 0.0, %v697
        %699 = vdwg.mxu0
        %v700 = vsub.f32 0.0, %v689
        %v701 = vsub.f32 0.0, %v692
        %v702 = vsub.f32 0.0, %v695
        %v703 = vsub.f32 0.0, %v698
        %v704 = vmul.f32 %v700, 1.442695
        %v705 = vpow.pop %v704
        %v706 = vmul.f32 %v701, 1.442695
        %v707 = vpow.pop %v706
        %v708 = vmul.f32 %v702, 1.442695
        %v709 = vpow.pop %v708
        %v710 = vmul.f32 %v703, 1.442695
        %v711 = vpow.pop %v710
        %v712 = vadd.f32 %v705, 1.0
        %v713 = vadd.f32 %v707, 1.0
        %v714 = vadd.f32 %v709, 1.0
        %v715 = vadd.f32 %v711, 1.0
        %v716 = vrcp.pop %v712
        %v717 = vmul.f32 %v712, %v716
        %v718 = vsub.f32 1.0, %v717
        %v719 = vmul.f32 %v716, %v718
        %v720 = vadd.f32 %v716, %v719
        %vm721 = vweird.f32 %v712
        %vm722 = vweird.f32 %v716
        %vm723 = vmor %vm721, %vm722
        %v724 = vsel %vm723, %v716, %v720
        %v725 = vand.u32 2147483647, %v712
        %vm726 = vcmp.eq.f32.partialorder %v725, 8.507059e+37
        %v727 = vand.u32 %v712, 2147483648
        %v728 = vor.u32 1.1754944e-38, %v727
        %v729 = vsel %vm726, %v728, %v724
        %v730 = vmul.f32 1.0, %v729
        %v731 = vrcp.pop %v713
        %v732 = vmul.f32 %v713, %v731
        %v733 = vsub.f32 1.0, %v732
        %v734 = vmul.f32 %v731, %v733
        %v735 = vadd.f32 %v731, %v734
        %vm736 = vweird.f32 %v713
        %vm737 = vweird.f32 %v731
        %vm738 = vmor %vm736, %vm737
        %v739 = vsel %vm738, %v731, %v735
        %v740 = vand.u32 2147483647, %v713
        %vm741 = vcmp.eq.f32.partialorder %v740, 8.507059e+37
        %v742 = vand.u32 %v713, 2147483648
        %v743 = vor.u32 1.1754944e-38, %v742
        %v744 = vsel %vm741, %v743, %v739
        %v745 = vmul.f32 1.0, %v744
        %v746 = vrcp.pop %v714
        %v747 = vmul.f32 %v714, %v746
        %v748 = vsub.f32 1.0, %v747
        %v749 = vmul.f32 %v746, %v748
        %v750 = vadd.f32 %v746, %v749
        %vm751 = vweird.f32 %v714
        %vm752 = vweird.f32 %v746
        %vm753 = vmor %vm751, %vm752
        %v754 = vsel %vm753, %v746, %v750
        %v755 = vand.u32 2147483647, %v714
        %vm756 = vcmp.eq.f32.partialorder %v755, 8.507059e+37
        %v757 = vand.u32 %v714, 2147483648
        %v758 = vor.u32 1.1754944e-38, %v757
        %v759 = vsel %vm756, %v758, %v754
        %v760 = vmul.f32 1.0, %v759
        %v761 = vrcp.pop %v715
        %v762 = vmul.f32 %v715, %v761
        %v763 = vsub.f32 1.0, %v762
        %v764 = vmul.f32 %v761, %v763
        %v765 = vadd.f32 %v761, %v764
        %vm766 = vweird.f32 %v715
        %vm767 = vweird.f32 %v761
        %vm768 = vmor %vm766, %vm767
        %v769 = vsel %vm768, %v761, %v765
        %v770 = vand.u32 2147483647, %v715
        %vm771 = vcmp.eq.f32.partialorder %v770, 8.507059e+37
        %v772 = vand.u32 %v715, 2147483648
        %v773 = vor.u32 1.1754944e-38, %v772
        %v774 = vsel %vm771, %v773, %v769
        %v775 = vmul.f32 1.0, %v774
        %vm776 = vcmask 130048
        %v778 = vsel %vm776, %v610, 0
        %v781 = vsel %vm776, %v625, 0
        %v784 = vsel %vm776, %v640, 0
        %v787 = vsel %vm776, %v655, 0
        %v790 = vsel %vm776, %v277, 0
        %v793 = vsel %vm776, %v278, 0
        %v796 = vsel %vm776, %v279, 0
        %v799 = vsel %vm776, %v280, 0
        %v802 = vsel %vm776, %v281, 0
        %v805 = vsel %vm776, %v282, 0
        %v808 = vsel %vm776, %v283, 0
        %v811 = vsel %vm776, %v284, 0
        %v814 = vsel %vm776, %v285, 0
        %v817 = vsel %vm776, %v286, 0
        %v820 = vsel %vm776, %v287, 0
        %v823 = vsel %vm776, %v288, 0
        %v826 = vsel %vm776, %v289, 0
        %v829 = vsel %vm776, %v290, 0
        %v832 = vsel %vm776, %v291, 0
        %v835 = vsel %vm776, %v292, 0
        %v838 = vsel %vm776, %v293, 0
        %v841 = vsel %vm776, %v294, 0
        %v844 = vsel %vm776, %v295, 0
        %v847 = vsel %vm776, %v296, 0
        %v850 = vsel %vm776, %v297, 0
        %v853 = vsel %vm776, %v298, 0
        %v856 = vsel %vm776, %v299, 0
        %v859 = vsel %vm776, %v300, 0
        %v862 = vsel %vm776, %v301, 0
        %v865 = vsel %vm776, %v302, 0
        %v868 = vsel %vm776, %v303, 0
        %v871 = vsel %vm776, %v304, 0
        %v874 = vsel %vm776, %v305, 0
        %v877 = vsel %vm776, %v306, 0
        %v880 = vsel %vm776, %v307, 0
        %v883 = vsel %vm776, %v308, 0
        %885 = vmatpush.xpose.msra.mxu0 %v835
        %886 = vmatpush.xpose.msra.mxu0 %v832
        %887 = vmatpush.xpose.msra.mxu0 %v829
        %888 = vmatpush.xpose.msra.mxu0 %v826
        %889 = vmatpush.xpose.msra.mxu0 %v823
        %890 = vmatpush.xpose.msra.mxu0 %v820
        %891 = vmatpush.xpose.msra.mxu0 %v817
        %892 = vmatpush.xpose.msra.mxu0 %v814
        %893 = vmatpush.xpose.msra.mxu0 %v811
        %894 = vmatpush.xpose.msra.mxu0 %v808
        %895 = vmatpush.xpose.msra.mxu0 %v805
        %896 = vmatpush.xpose.msra.mxu0 %v802
        %897 = vmatpush.xpose.msra.mxu0 %v799
        %898 = vmatpush.xpose.msra.mxu0 %v796
        %899 = vmatpush.xpose.msra.mxu0 %v793
        %900 = vmatpush.xpose.msra.mxu0 %v790
        %901 = vmatmul.f32.gmra.mxu0 %v778
        %v902 = vpop.f32.mrf.mxu0
        %v903 = vadd.f32 0.0, %v902
        %904 = vmatmul.f32.gmra.mxu0 %v781
        %v905 = vpop.f32.mrf.mxu0
        %v906 = vadd.f32 0.0, %v905
        %907 = vmatmul.f32.gmra.mxu0 %v784
        %v908 = vpop.f32.mrf.mxu0
        %v909 = vadd.f32 0.0, %v908
        %910 = vmatmul.f32.gmra.mxu0 %v787
        %v911 = vpop.f32.mrf.mxu0
        %v912 = vadd.f32 0.0, %v911
        %913 = vdwg.mxu0
        %914 = vmatpush.xpose.msra.mxu0 %v883
        %915 = vmatpush.xpose.msra.mxu0 %v880
        %916 = vmatpush.xpose.msra.mxu0 %v877
        %917 = vmatpush.xpose.msra.mxu0 %v874
        %918 = vmatpush.xpose.msra.mxu0 %v871
        %919 = vmatpush.xpose.msra.mxu0 %v868
        %920 = vmatpush.xpose.msra.mxu0 %v865
        %921 = vmatpush.xpose.msra.mxu0 %v862
        %922 = vmatpush.xpose.msra.mxu0 %v859
        %923 = vmatpush.xpose.msra.mxu0 %v856
        %924 = vmatpush.xpose.msra.mxu0 %v853
        %925 = vmatpush.xpose.msra.mxu0 %v850
        %926 = vmatpush.xpose.msra.mxu0 %v847
        %927 = vmatpush.xpose.msra.mxu0 %v844
        %928 = vmatpush.xpose.msra.mxu0 %v841
        %929 = vmatpush.xpose.msra.mxu0 %v838
        %930 = vmatmul.f32.gmra.mxu0 %v778
        %v931 = vpop.f32.mrf.mxu0
        %v932 = vadd.f32 0.0, %v931
        %933 = vmatmul.f32.gmra.mxu0 %v781
        %v934 = vpop.f32.mrf.mxu0
        %v935 = vadd.f32 0.0, %v934
        %936 = vmatmul.f32.gmra.mxu0 %v784
        %v937 = vpop.f32.mrf.mxu0
        %v938 = vadd.f32 0.0, %v937
        %939 = vmatmul.f32.gmra.mxu0 %v787
        %v940 = vpop.f32.mrf.mxu0
        %v941 = vadd.f32 0.0, %v940
        %942 = vdwg.mxu0
        %v944 = vsel %vm776, %v730, 0
        %v947 = vsel %vm776, %v745, 0
        %v950 = vsel %vm776, %v760, 0
        %v953 = vsel %vm776, %v775, 0
        %v956 = vsel %vm776, %v309, 0
        %v959 = vsel %vm776, %v310, 0
        %v962 = vsel %vm776, %v311, 0
        %v965 = vsel %vm776, %v312, 0
        %v968 = vsel %vm776, %v313, 0
        %v971 = vsel %vm776, %v314, 0
        %v974 = vsel %vm776, %v315, 0
        %v977 = vsel %vm776, %v316, 0
        %v980 = vsel %vm776, %v317, 0
        %v983 = vsel %vm776, %v318, 0
        %v986 = vsel %vm776, %v319, 0
        %v989 = vsel %vm776, %v320, 0
        %v992 = vsel %vm776, %v321, 0
        %v995 = vsel %vm776, %v322, 0
        %v998 = vsel %vm776, %v323, 0
        %v1001 = vsel %vm776, %v324, 0
        %v1004 = vsel %vm776, %v325, 0
        %v1007 = vsel %vm776, %v326, 0
        %v1010 = vsel %vm776, %v327, 0
        %v1013 = vsel %vm776, %v328, 0
        %v1016 = vsel %vm776, %v329, 0
        %v1019 = vsel %vm776, %v330, 0
        %v1022 = vsel %vm776, %v331, 0
        %v1025 = vsel %vm776, %v332, 0
        %v1028 = vsel %vm776, %v333, 0
        %v1031 = vsel %vm776, %v334, 0
        %v1034 = vsel %vm776, %v335, 0
        %v1037 = vsel %vm776, %v336, 0
        %v1040 = vsel %vm776, %v337, 0
        %v1043 = vsel %vm776, %v338, 0
        %v1046 = vsel %vm776, %v339, 0
        %v1049 = vsel %vm776, %v340, 0
        %1051 = vmatpush.xpose.msra.mxu0 %v1001
        %1052 = vmatpush.xpose.msra.mxu0 %v998
        %1053 = vmatpush.xpose.msra.mxu0 %v995
        %1054 = vmatpush.xpose.msra.mxu0 %v992
        %1055 = vmatpush.xpose.msra.mxu0 %v989
        %1056 = vmatpush.xpose.msra.mxu0 %v986
        %1057 = vmatpush.xpose.msra.mxu0 %v983
        %1058 = vmatpush.xpose.msra.mxu0 %v980
        %1059 = vmatpush.xpose.msra.mxu0 %v977
        %1060 = vmatpush.xpose.msra.mxu0 %v974
        %1061 = vmatpush.xpose.msra.mxu0 %v971
        %1062 = vmatpush.xpose.msra.mxu0 %v968
        %1063 = vmatpush.xpose.msra.mxu0 %v965
        %1064 = vmatpush.xpose.msra.mxu0 %v962
        %1065 = vmatpush.xpose.msra.mxu0 %v959
        %1066 = vmatpush.xpose.msra.mxu0 %v956
        %1067 = vmatmul.f32.gmra.mxu0 %v944
        %v1068 = vpop.f32.mrf.mxu0
        %v1069 = vadd.f32 0.0, %v1068
        %1070 = vmatmul.f32.gmra.mxu0 %v947
        %v1071 = vpop.f32.mrf.mxu0
        %v1072 = vadd.f32 0.0, %v1071
        %1073 = vmatmul.f32.gmra.mxu0 %v950
        %v1074 = vpop.f32.mrf.mxu0
        %v1075 = vadd.f32 0.0, %v1074
        %1076 = vmatmul.f32.gmra.mxu0 %v953
        %v1077 = vpop.f32.mrf.mxu0
        %v1078 = vadd.f32 0.0, %v1077
        %1079 = vdwg.mxu0
        %1080 = vmatpush.xpose.msra.mxu0 %v1049
        %1081 = vmatpush.xpose.msra.mxu0 %v1046
        %1082 = vmatpush.xpose.msra.mxu0 %v1043
        %1083 = vmatpush.xpose.msra.mxu0 %v1040
        %1084 = vmatpush.xpose.msra.mxu0 %v1037
        %1085 = vmatpush.xpose.msra.mxu0 %v1034
        %1086 = vmatpush.xpose.msra.mxu0 %v1031
        %1087 = vmatpush.xpose.msra.mxu0 %v1028
        %1088 = vmatpush.xpose.msra.mxu0 %v1025
        %1089 = vmatpush.xpose.msra.mxu0 %v1022
        %1090 = vmatpush.xpose.msra.mxu0 %v1019
        %1091 = vmatpush.xpose.msra.mxu0 %v1016
        %1092 = vmatpush.xpose.msra.mxu0 %v1013
        %1093 = vmatpush.xpose.msra.mxu0 %v1010
        %1094 = vmatpush.xpose.msra.mxu0 %v1007
        %1095 = vmatpush.xpose.msra.mxu0 %v1004
        %1096 = vmatmul.f32.gmra.mxu0 %v944
        %v1097 = vpop.f32.mrf.mxu0
        %v1098 = vadd.f32 0.0, %v1097
        %1099 = vmatmul.f32.gmra.mxu0 %v947
        %v1100 = vpop.f32.mrf.mxu0
        %v1101 = vadd.f32 0.0, %v1100
        %1102 = vmatmul.f32.gmra.mxu0 %v950
        %v1103 = vpop.f32.mrf.mxu0
        %v1104 = vadd.f32 0.0, %v1103
        %1105 = vmatmul.f32.gmra.mxu0 %v953
        %v1106 = vpop.f32.mrf.mxu0
        %v1107 = vadd.f32 0.0, %v1106
        %1108 = vdwg.mxu0
        %v1109 = vmul.f32 %v903, %v1069
        %v1110 = vmul.f32 %v932, %v1098
        %v1111 = vmul.f32 %v906, %v1072
        %v1112 = vmul.f32 %v935, %v1101
        %v1113 = vmul.f32 %v909, %v1075
        %v1114 = vmul.f32 %v938, %v1104
        %v1115 = vmul.f32 %v912, %v1078
        %v1116 = vmul.f32 %v941, %v1107
        %v1117 = vmul.f32 %v351, %v1109
        %v1118 = vmul.f32 %v352, %v1110
        %v1119 = vmul.f32 %v353, %v1111
        %v1120 = vmul.f32 %v354, %v1112
        %v1121 = vmul.f32 %v355, %v1113
        %v1122 = vmul.f32 %v356, %v1114
        %v1123 = vmul.f32 %v357, %v1115
        %v1124 = vmul.f32 %v358, %v1116
        %1125 = vst [vmem:[%s271] sm:$0xff] %v1117
        %1126 = vst [vmem:[%s271 + $0x8] sm:$0xff] %v1118
        %1127 = vst [vmem:[%s271 + $0x10] sm:$0xff] %v1119
        %1128 = vst [vmem:[%s271 + $0x18] sm:$0xff] %v1120
        %1129 = vst [vmem:[%s271 + $0x20] sm:$0xff] %v1121
        %1130 = vst [vmem:[%s271 + $0x28] sm:$0xff] %v1122
        %1131 = vst [vmem:[%s271 + $0x30] sm:$0xff] %v1123
        %1132 = vst [vmem:[%s271 + $0x38] sm:$0xff] %v1124
        %s1133 = sand.u32 %s181, 1
        %s1134 = scalar_lea.sflag [#allocation3], %s1133
        %s1135 = sand.u32 %s181, 1
        %s1136 = smul.addr %s1135, 64
        %s1137 = scalar_lea.vmem [#allocation2], %s1136
        // Predicated region
        $region49: #{tpu_custom_call.1} parent=47 // pred_check
          %p1138 = pneg %p191
        $region50: #{tpu_custom_call.1} parent=47 // pred_check_branch
          %1140 = sbr.rel (%p1138) target = $region52
        $region51: #{tpu_custom_call.1} parent=47 // pred_region
          %1142 = vsyncadd %s1134, 0
          %s1143 = smul.addr %s21, 8
          %s1144 = smul.addr %s1143, 8
          %s1145 = scalar_lea.hbm %s7, %s1144
          %s1146 = sshll.u32 %s1137, 4
          %s1147 = int_to_ptr.vmem [resolvable:$true] %s1146
          %s1148 = sshll.u32 %s1145, 4
          %s1149 = int_to_ptr.hbm [resolvable:$true] %s1148
          %1154 = dma.vmem_to_hbm [thread:$0]  %s1147, 1024, %s1149, %s1134, 256, 256, 16
        $region52: #{tpu_custom_call.1} parent=47 // pred_fallthru
          _
      $region48: #{tpu_custom_call.1} parent=5 // pred_fallthru
        _
      %p1155 = scmp.le.s32.totalorder 2, %s16
      // Predicated region
      $region53: #{tpu_custom_call.1} parent=5 // pred_check
        %p1156 = pneg %p1155
      $region54: #{tpu_custom_call.1} parent=5 // pred_check_branch
        %1158 = sbr.rel (%p1156) target = $region56
      $region55: #{tpu_custom_call.1} parent=5 // pred_region
        %s1159 = ssub.s32 %s16, 2
        // Predicated region
        $region57: #{tpu_custom_call.1} parent=55 // pred_check
          %p1160 = pneg %p197
        $region58: #{tpu_custom_call.1} parent=55 // pred_check_branch
          %1162 = sbr.rel (%p1160) target = $region60
        $region59: #{tpu_custom_call.1} parent=55 // pred_region
          %s1163 = sand.u32 %s182, 1
          %s1164 = scalar_lea.sflag [#allocation3], %s1163
          %s1165 = sand.u32 %s182, 1
          %s1166 = smul.addr %s1165, 64
          %s1167 = scalar_lea.vmem [#allocation2], %s1166
          %1169 = dma.done %s1164, 1024
        $region60: #{tpu_custom_call.1} parent=55 // pred_fallthru
          _
      $region56: #{tpu_custom_call.1} parent=5 // pred_fallthru
        _
    $region6: #{tpu_custom_call.1} parent=1 // loop_footer
      %s20 = sadd.s32 1, %s16
    $region7: #{tpu_custom_call.1} parent=1 // loop_footer_branch
      %15 = sbr.rel target = $region3
    $region8: #{tpu_custom_call.1} parent=1 // loop_exit
      _
    %1170 = vsyncpa [#allocation3], 1
    %s1171 = scalar_lea.sflag [#allocation3], 1
    %1172 = vsyncpa %s1171, 1

</llo_original>
